<compile_context>
chip_gen: v7x
topology: tpu7x:2x2x1
jax: 0.10.0
libtpu: 0.0.40
codegen_flags: <defaults>
</compile_context>

<pallas_src>
import functools

import jax
import jax.numpy as jnp
from jax import lax
from jax.experimental import pallas as pl
from jax.experimental.pallas import tpu as pltpu


def _round_up(x, m):
    return (x + m - 1) // m * m


def _chip_defaults():
    """Per-generation (default row tile, vmem_limit_bytes)."""
    vmem_cap = 64 * 1024 * 1024              # conservative: v7x per-TC VMEM
    try:
        cap = getattr(pltpu.get_tpu_info(), "vmem_capacity_bytes", None)
        if cap:
            vmem_cap = int(cap)
    except Exception:
        pass
    if vmem_cap >= 100 * 1024 * 1024:        # v5e / v6e: 128 MiB physical VMEM
        return 1024, 96 * 1024 * 1024
    return 512, 48 * 1024 * 1024             # v7x: 64 MiB per TensorCore


def _fit_tm(tm, per_row_bytes, fixed_bytes, vmem_limit):
    """Shrink the row tile until the pipelined footprint fits in VMEM."""
    budget = int(vmem_limit * 0.8) - fixed_bytes
    while tm > 8 and tm * per_row_bytes > budget:
        tm //= 2
    return max(8, (tm // 8) * 8)


def roberta_self_output_kernel(x_ref, wt_ref, b_ref, res_ref, gamma_ref,
                               beta_ref, o_ref, *, eps, inv_h):
    # x_ref:      (TM, H) hidden_states row-tile (matmul dtype)
    # wt_ref:     (H, H)  dense weight pre-transposed to (in_features, out_features)
    # b_ref:      (1, H)  dense bias
    # res_ref:    (TM, H) residual (input_tensor) row-tile
    # gamma/beta: (1, H)  LayerNorm affine params
    # MXU matmul: contract x's last axis with W^T's leading axis (no in-kernel
    # transpose of the resident weight), f32 accumulation.
    y = jnp.dot(x_ref[...], wt_ref[...], preferred_element_type=jnp.float32)

    # TODO(synk): dropout is identity in eval mode; training-mode dropout
    # (pltpu.prng_random_bits + mask) is not implemented here.

    # Bias + residual add, f32 epilogue.
    y = y + b_ref[...].astype(jnp.float32) + res_ref[...].astype(jnp.float32)

    # LayerNorm over the hidden (lane) axis; divides replaced by * inv_h.
    mean = y.sum(axis=-1, keepdims=True) * inv_h
    centered = y - mean
    var = (centered * centered).sum(axis=-1, keepdims=True) * inv_h
    out = (centered * lax.rsqrt(var + eps) * gamma_ref[...].astype(jnp.float32)
           + beta_ref[...].astype(jnp.float32))

    o_ref[...] = out.astype(o_ref.dtype)


def roberta_self_output(hidden_states, input_tensor, dense_w, dense_b,
                        ln_gamma, ln_beta, ln_eps, *, tm=None,
                        matmul_dtype=None):
    """Fused dense + (eval) dropout + residual + LayerNorm.

    hidden_states, input_tensor: (B, S, H)
    dense_w: (H, H) in PyTorch nn.Linear (out_features, in_features) layout.
    matmul_dtype: optionally cast x / W^T (e.g. jnp.bfloat16) before the MXU
      for full-rate matmul; accumulation and the LayerNorm epilogue stay f32.
    """
    B, S, H = hidden_states.shape
    M = B * S

    x2d = hidden_states.reshape(M, H)
    r2d = input_tensor.reshape(M, H)
    # One-time transpose in the wrapper (HBM, hoisted/folded by XLA under jit)
    # so the kernel never re-transposes the resident weight per grid step.
    wt = jnp.transpose(dense_w)              # (in_features, out_features)
    b2d = dense_b.reshape(1, H)
    g2d = ln_gamma.reshape(1, H)
    be2d = ln_beta.reshape(1, H)

    if matmul_dtype is not None:
        x2d = x2d.astype(matmul_dtype)
        wt = wt.astype(matmul_dtype)

    default_tm, vmem_limit = _chip_defaults()
    if tm is None:
        tm = default_tm

    # Row tile: multiple of 8 sublanes, capped so the grid has >= 2 steps
    # whenever M > 8 (v7x megacore sharding + engaged double-buffering), then
    # shrunk if the pipelined VMEM footprint would not fit.
    TM = min(tm, max(8, _round_up(pl.cdiv(M, 2), 8)))
    io_item = jnp.dtype(hidden_states.dtype).itemsize
    x_item = jnp.dtype(x2d.dtype).itemsize
    per_row_bytes = 2 * H * (x_item + 2 * io_item)        # x + residual + out
    fixed_bytes = 2 * H * H * jnp.dtype(wt.dtype).itemsize + (1 << 20)
    TM = _fit_tm(TM, per_row_bytes, fixed_bytes, vmem_limit)

    # No full-array padding: Pallas masks the ragged tail block (row-wise
    # LayerNorm, so garbage tail rows never affect valid rows; their stores
    # are dropped).
    grid = (pl.cdiv(M, TM),)

    kernel = functools.partial(roberta_self_output_kernel,
                               eps=float(ln_eps), inv_h=1.0 / H)

    # TODO(synk): for H < 128 the output last dim forces masked partial stores
    # and under-utilizes MXU lanes; inherent to this layout, not fixable by
    # tiling choices here.

    def run(single_buffer_resident):
        resident_kw = ({"pipeline_mode": pl.Buffered(1)}
                       if single_buffer_resident else {})
        in_specs = [
            pl.BlockSpec((TM, H), lambda i: (i, 0)),                 # x row-tile
            pl.BlockSpec((H, H), lambda i: (0, 0), **resident_kw),   # W^T (resident)
            pl.BlockSpec((1, H), lambda i: (0, 0), **resident_kw),   # bias
            pl.BlockSpec((TM, H), lambda i: (i, 0)),                 # residual row-tile
            pl.BlockSpec((1, H), lambda i: (0, 0), **resident_kw),   # gamma
            pl.BlockSpec((1, H), lambda i: (0, 0), **resident_kw),   # beta
        ]
        out_specs = pl.BlockSpec((TM, H), lambda i: (i, 0))
        return pl.pallas_call(
            kernel,
            out_shape=jax.ShapeDtypeStruct((M, H), hidden_states.dtype),
            grid_spec=pltpu.PrefetchScalarGridSpec(
                num_scalar_prefetch=0,
                grid=grid,
                in_specs=in_specs,
                out_specs=out_specs,
            ),
            compiler_params=pltpu.CompilerParams(
                dimension_semantics=("parallel",),   # row-tiles independent
                vmem_limit_bytes=vmem_limit,
            ),
        )(x2d, wt, b2d, r2d, g2d, be2d)

    try:
        # Single-buffer the constant-index resident operands (saves 2*H*H
        # bytes of dead VMEM; matters most on v7x's 64 MiB VMEM).
        out2d = run(True)
    except Exception:
        # pl.Buffered(1) not accepted by this jax version -> fall back to the
        # default double-buffered resident operands.
        out2d = run(False)

    return out2d.reshape(B, S, H)


def _reference(hidden_states, input_tensor, dense_w, dense_b, ln_gamma,
               ln_beta, ln_eps):
    y = jnp.einsum("bsh,oh->bso", hidden_states, dense_w) + dense_b
    y = y + input_tensor
    mean = jnp.mean(y, axis=-1, keepdims=True)
    var = jnp.mean((y - mean) ** 2, axis=-1, keepdims=True)
    return (y - mean) / jnp.sqrt(var + ln_eps) * ln_gamma + ln_beta


def _make_inputs(key, B, S, H):
    k1, k2, k3, k4, k5 = jax.random.split(key, 5)
    hidden_states = jax.random.normal(k1, (B, S, H), dtype=jnp.float32)
    input_tensor = jax.random.normal(k2, (B, S, H), dtype=jnp.float32)
    # nn.Linear(H, H): weight (out, in), bias (H,)
    dense_w = jax.random.normal(k3, (H, H), dtype=jnp.float32) * 0.02
    dense_b = jax.random.normal(k4, (H,), dtype=jnp.float32) * 0.02
    # nn.LayerNorm(H): gamma ~ ones (slightly perturbed), beta zeros
    ln_gamma = jnp.ones((H,), dtype=jnp.float32) + 0.01 * jax.random.normal(k5, (H,))
    ln_beta = jnp.zeros((H,), dtype=jnp.float32)
    return hidden_states, input_tensor, dense_w, dense_b, ln_gamma, ln_beta


if __name__ == "__main__":
    ln_eps = 1e-5
    key = jax.random.PRNGKey(0)
    k_a, k_b = jax.random.split(key, 2)

    # Primary config (module spec scale): hidden_size=32, eval dropout.
    B, S, H = 2, 8, 32
    hs, res, w, b, g, be = _make_inputs(k_a, B, S, H)
    out = jax.block_until_ready(
        roberta_self_output(hs, res, w, b, g, be, ln_eps))
    ref = _reference(hs, res, w, b, g, be, ln_eps)
    assert out.shape == (B, S, H)
    assert jnp.allclose(out, ref, atol=1e-4, rtol=1e-4), "mismatch (primary)"

    # Secondary config: multi-step grid + ragged (masked) tail block at H=128
    # (M=50, TM=16 -> 4 grid steps, last block only partially valid).
    B2, S2, H2 = 2, 25, 128
    hs2, res2, w2, b2, g2, be2 = _make_inputs(k_b, B2, S2, H2)
    out2 = jax.block_until_ready(
        roberta_self_output(hs2, res2, w2, b2, g2, be2, ln_eps, tm=16))
    ref2 = _reference(hs2, res2, w2, b2, g2, be2, ln_eps)
    assert out2.shape == (B2, S2, H2)
    assert jnp.allclose(out2, ref2, atol=1e-4, rtol=1e-4), "mismatch (tiled/tail)"

    print("KERNEL_OK")
</pallas_src>

<mosaic_0001>
module attributes {stable_mosaic.version = 11 : i64} {
  func.func @roberta_self_output_kernel(%arg0: i32, %arg1: memref<8x32xf32, #tpu.memory_space<vmem>>, %arg2: memref<32x32xf32, #tpu.memory_space<vmem>>, %arg3: memref<1x32xf32, #tpu.memory_space<vmem>>, %arg4: memref<8x32xf32, #tpu.memory_space<vmem>>, %arg5: memref<1x32xf32, #tpu.memory_space<vmem>>, %arg6: memref<1x32xf32, #tpu.memory_space<vmem>>, %arg7: memref<8x32xf32, #tpu.memory_space<vmem>>) attributes {dimension_semantics = [#tpu.dimension_semantics<parallel>], iteration_bounds = array<i64: 2>, scalar_prefetch = 0 : i64, scratch_operands = 0 : i64, tpu.core_type = #tpu.core_type<tc>, window_params = [{transform_indices = @transform_0, window_bounds = array<i64: 8, 32>}, {pipeline_mode = #tpu.pipeline_mode<synchronous>, transform_indices = @transform_1, window_bounds = array<i64: 32, 32>}, {pipeline_mode = #tpu.pipeline_mode<synchronous>, transform_indices = @transform_2, window_bounds = array<i64: 1, 32>}, {transform_indices = @transform_3, window_bounds = array<i64: 8, 32>}, {pipeline_mode = #tpu.pipeline_mode<synchronous>, transform_indices = @transform_4, window_bounds = array<i64: 1, 32>}, {pipeline_mode = #tpu.pipeline_mode<synchronous>, transform_indices = @transform_5, window_bounds = array<i64: 1, 32>}, {transform_indices = @transform_6, window_bounds = array<i64: 8, 32>}]} {
    %c0 = arith.constant 0 : index
    %c0_0 = arith.constant 0 : index
    %0 = vector.load %arg1[%c0, %c0_0] : memref<8x32xf32, #tpu.memory_space<vmem>>, vector<8x32xf32>
    %c0_1 = arith.constant 0 : index
    %c0_2 = arith.constant 0 : index
    %1 = vector.load %arg2[%c0_1, %c0_2] : memref<32x32xf32, #tpu.memory_space<vmem>>, vector<32x32xf32>
    %cst = arith.constant dense<0.000000e+00> : vector<8x32xf32>
    %2 = tpu.matmul %0, %1, %cst {dimension_numbers = #tpu.dot_dimension_numbers<[1], [0], [0], [1], [0, 0, 1, 1], [], []>} : vector<8x32xf32>, vector<32x32xf32>, vector<8x32xf32> -> vector<8x32xf32>
    %c0_3 = arith.constant 0 : index
    %c0_4 = arith.constant 0 : index
    %3 = vector.load %arg3[%c0_3, %c0_4] : memref<1x32xf32, #tpu.memory_space<vmem>>, vector<1x32xf32>
    %4 = vector.broadcast %3 : vector<1x32xf32> to vector<8x32xf32>
    %5 = arith.addf %2, %4 : vector<8x32xf32>
    %c0_5 = arith.constant 0 : index
    %c0_6 = arith.constant 0 : index
    %6 = vector.load %arg4[%c0_5, %c0_6] : memref<8x32xf32, #tpu.memory_space<vmem>>, vector<8x32xf32>
    %7 = arith.addf %5, %6 : vector<8x32xf32>
    %cst_7 = arith.constant dense<0.000000e+00> : vector<8xf32>
    %8 = vector.multi_reduction <add>, %7, %cst_7 [1] : vector<8x32xf32> to vector<8xf32>
    %9 = vector.shape_cast %8 : vector<8xf32> to vector<8x1xf32>
    %cst_8 = arith.constant 3.125000e-02 : f32
    %10 = vector.broadcast %cst_8 : f32 to vector<8x1xf32>
    %11 = arith.mulf %9, %10 : vector<8x1xf32>
    %12 = vector.broadcast %11 : vector<8x1xf32> to vector<8x32xf32>
    %13 = arith.subf %7, %12 : vector<8x32xf32>
    %14 = arith.mulf %13, %13 : vector<8x32xf32>
    %cst_9 = arith.constant dense<0.000000e+00> : vector<8xf32>
    %15 = vector.multi_reduction <add>, %14, %cst_9 [1] : vector<8x32xf32> to vector<8xf32>
    %16 = vector.shape_cast %15 : vector<8xf32> to vector<8x1xf32>
    %cst_10 = arith.constant 3.125000e-02 : f32
    %17 = vector.broadcast %cst_10 : f32 to vector<8x1xf32>
    %18 = arith.mulf %16, %17 : vector<8x1xf32>
    %cst_11 = arith.constant 9.99999974E-6 : f32
    %19 = vector.broadcast %cst_11 : f32 to vector<8x1xf32>
    %20 = arith.addf %18, %19 : vector<8x1xf32>
    %21 = math.rsqrt %20 : vector<8x1xf32>
    %22 = vector.broadcast %21 : vector<8x1xf32> to vector<8x32xf32>
    %23 = arith.mulf %13, %22 : vector<8x32xf32>
    %c0_12 = arith.constant 0 : index
    %c0_13 = arith.constant 0 : index
    %24 = vector.load %arg5[%c0_12, %c0_13] : memref<1x32xf32, #tpu.memory_space<vmem>>, vector<1x32xf32>
    %25 = vector.broadcast %24 : vector<1x32xf32> to vector<8x32xf32>
    %26 = arith.mulf %23, %25 : vector<8x32xf32>
    %c0_14 = arith.constant 0 : index
    %c0_15 = arith.constant 0 : index
    %27 = vector.load %arg6[%c0_14, %c0_15] : memref<1x32xf32, #tpu.memory_space<vmem>>, vector<1x32xf32>
    %28 = vector.broadcast %27 : vector<1x32xf32> to vector<8x32xf32>
    %29 = arith.addf %26, %28 : vector<8x32xf32>
    %c0_16 = arith.constant 0 : index
    %c0_17 = arith.constant 0 : index
    %30 = vector.load %arg7[%c0_16, %c0_17] : memref<8x32xf32, #tpu.memory_space<vmem>>, vector<8x32xf32>
    tpu.vector_store %arg7[%c0_16, %c0_17], %29 {strides = array<i32>} : memref<8x32xf32, #tpu.memory_space<vmem>>, vector<8x32xf32>,
    return
  }
  func.func @transform_0(%arg0: i32) -> (i32, i32) {
    %c0_i32 = arith.constant 0 : i32
    %c0_i32_0 = arith.constant 0 : i32
    return %arg0, %c0_i32 : i32, i32
  }
  func.func @transform_1(%arg0: i32) -> (i32, i32) {
    %c0_i32 = arith.constant 0 : i32
    %c0_i32_0 = arith.constant 0 : i32
    %c0_i32_1 = arith.constant 0 : i32
    return %c0_i32, %c0_i32_0 : i32, i32
  }
  func.func @transform_2(%arg0: i32) -> (i32, i32) {
    %c0_i32 = arith.constant 0 : i32
    %c0_i32_0 = arith.constant 0 : i32
    %c0_i32_1 = arith.constant 0 : i32
    return %c0_i32, %c0_i32_0 : i32, i32
  }
  func.func @transform_3(%arg0: i32) -> (i32, i32) {
    %c0_i32 = arith.constant 0 : i32
    %c0_i32_0 = arith.constant 0 : i32
    return %arg0, %c0_i32 : i32, i32
  }
  func.func @transform_4(%arg0: i32) -> (i32, i32) {
    %c0_i32 = arith.constant 0 : i32
    %c0_i32_0 = arith.constant 0 : i32
    %c0_i32_1 = arith.constant 0 : i32
    return %c0_i32, %c0_i32_0 : i32, i32
  }
  func.func @transform_5(%arg0: i32) -> (i32, i32) {
    %c0_i32 = arith.constant 0 : i32
    %c0_i32_0 = arith.constant 0 : i32
    %c0_i32_1 = arith.constant 0 : i32
    return %c0_i32, %c0_i32_0 : i32, i32
  }
  func.func @transform_6(%arg0: i32) -> (i32, i32) {
    %c0_i32 = arith.constant 0 : i32
    %c0_i32_0 = arith.constant 0 : i32
    return %arg0, %c0_i32 : i32, i32
  }
}

module attributes {stable_mosaic.version = 11 : i64} {
  func.func @roberta_self_output_kernel(%arg0: i32, %arg1: memref<8x32xf32, #tpu.memory_space<vmem>>, %arg2: memref<32x32xf32, #tpu.memory_space<vmem>>, %arg3: memref<1x32xf32, #tpu.memory_space<vmem>>, %arg4: memref<8x32xf32, #tpu.memory_space<vmem>>, %arg5: memref<1x32xf32, #tpu.memory_space<vmem>>, %arg6: memref<1x32xf32, #tpu.memory_space<vmem>>, %arg7: memref<8x32xf32, #tpu.memory_space<vmem>>) attributes {dimension_semantics = [#tpu.dimension_semantics<parallel>], iteration_bounds = array<i64: 2>, scalar_prefetch = 0 : i64, scratch_operands = 0 : i64, tpu.core_type = #tpu.core_type<tc>, window_params = [{transform_indices = @transform_0, window_bounds = array<i64: 8, 32>}, {pipeline_mode = #tpu.pipeline_mode<synchronous>, transform_indices = @transform_1, window_bounds = array<i64: 32, 32>}, {pipeline_mode = #tpu.pipeline_mode<synchronous>, transform_indices = @transform_2, window_bounds = array<i64: 1, 32>}, {transform_indices = @transform_3, window_bounds = array<i64: 8, 32>}, {pipeline_mode = #tpu.pipeline_mode<synchronous>, transform_indices = @transform_4, window_bounds = array<i64: 1, 32>}, {pipeline_mode = #tpu.pipeline_mode<synchronous>, transform_indices = @transform_5, window_bounds = array<i64: 1, 32>}, {transform_indices = @transform_6, window_bounds = array<i64: 8, 32>}]} {
    %c0 = arith.constant 0 : index
    %c0_0 = arith.constant 0 : index
    %0 = vector.load %arg1[%c0, %c0_0] : memref<8x32xf32, #tpu.memory_space<vmem>>, vector<8x32xf32>
    %c0_1 = arith.constant 0 : index
    %c0_2 = arith.constant 0 : index
    %1 = vector.load %arg2[%c0_1, %c0_2] : memref<32x32xf32, #tpu.memory_space<vmem>>, vector<32x32xf32>
    %cst = arith.constant dense<0.000000e+00> : vector<8x32xf32>
    %2 = tpu.matmul %0, %1, %cst {dimension_numbers = #tpu.dot_dimension_numbers<[1], [0], [0], [1], [0, 0, 1, 1], [], []>} : vector<8x32xf32>, vector<32x32xf32>, vector<8x32xf32> -> vector<8x32xf32>
    %c0_3 = arith.constant 0 : index
    %c0_4 = arith.constant 0 : index
    %3 = vector.load %arg3[%c0_3, %c0_4] : memref<1x32xf32, #tpu.memory_space<vmem>>, vector<1x32xf32>
    %4 = vector.broadcast %3 : vector<1x32xf32> to vector<8x32xf32>
    %5 = arith.addf %2, %4 : vector<8x32xf32>
    %c0_5 = arith.constant 0 : index
    %c0_6 = arith.constant 0 : index
    %6 = vector.load %arg4[%c0_5, %c0_6] : memref<8x32xf32, #tpu.memory_space<vmem>>, vector<8x32xf32>
    %7 = arith.addf %5, %6 : vector<8x32xf32>
    %cst_7 = arith.constant dense<0.000000e+00> : vector<8xf32>
    %8 = vector.multi_reduction <add>, %7, %cst_7 [1] : vector<8x32xf32> to vector<8xf32>
    %9 = vector.shape_cast %8 : vector<8xf32> to vector<8x1xf32>
    %cst_8 = arith.constant 3.125000e-02 : f32
    %10 = vector.broadcast %cst_8 : f32 to vector<8x1xf32>
    %11 = arith.mulf %9, %10 : vector<8x1xf32>
    %12 = vector.broadcast %11 : vector<8x1xf32> to vector<8x32xf32>
    %13 = arith.subf %7, %12 : vector<8x32xf32>
    %14 = arith.mulf %13, %13 : vector<8x32xf32>
    %cst_9 = arith.constant dense<0.000000e+00> : vector<8xf32>
    %15 = vector.multi_reduction <add>, %14, %cst_9 [1] : vector<8x32xf32> to vector<8xf32>
    %16 = vector.shape_cast %15 : vector<8xf32> to vector<8x1xf32>
    %cst_10 = arith.constant 3.125000e-02 : f32
    %17 = vector.broadcast %cst_10 : f32 to vector<8x1xf32>
    %18 = arith.mulf %16, %17 : vector<8x1xf32>
    %cst_11 = arith.constant 9.99999974E-6 : f32
    %19 = vector.broadcast %cst_11 : f32 to vector<8x1xf32>
    %20 = arith.addf %18, %19 : vector<8x1xf32>
    %21 = math.rsqrt %20 : vector<8x1xf32>
    %22 = vector.broadcast %21 : vector<8x1xf32> to vector<8x32xf32>
    %23 = arith.mulf %13, %22 : vector<8x32xf32>
    %c0_12 = arith.constant 0 : index
    %c0_13 = arith.constant 0 : index
    %24 = vector.load %arg5[%c0_12, %c0_13] : memref<1x32xf32, #tpu.memory_space<vmem>>, vector<1x32xf32>
    %25 = vector.broadcast %24 : vector<1x32xf32> to vector<8x32xf32>
    %26 = arith.mulf %23, %25 : vector<8x32xf32>
    %c0_14 = arith.constant 0 : index
    %c0_15 = arith.constant 0 : index
    %27 = vector.load %arg6[%c0_14, %c0_15] : memref<1x32xf32, #tpu.memory_space<vmem>>, vector<1x32xf32>
    %28 = vector.broadcast %27 : vector<1x32xf32> to vector<8x32xf32>
    %29 = arith.addf %26, %28 : vector<8x32xf32>
    %c0_16 = arith.constant 0 : index
    %c0_17 = arith.constant 0 : index
    %30 = vector.load %arg7[%c0_16, %c0_17] : memref<8x32xf32, #tpu.memory_space<vmem>>, vector<8x32xf32>
    tpu.vector_store %arg7[%c0_16, %c0_17], %29 {strides = array<i32>} : memref<8x32xf32, #tpu.memory_space<vmem>>, vector<8x32xf32>,
    return
  }
  func.func @transform_0(%arg0: i32) -> (i32, i32) {
    %c0_i32 = arith.constant 0 : i32
    %c0_i32_0 = arith.constant 0 : i32
    return %arg0, %c0_i32 : i32, i32
  }
  func.func @transform_1(%arg0: i32) -> (i32, i32) {
    %c0_i32 = arith.constant 0 : i32
    %c0_i32_0 = arith.constant 0 : i32
    %c0_i32_1 = arith.constant 0 : i32
    return %c0_i32, %c0_i32_0 : i32, i32
  }
  func.func @transform_2(%arg0: i32) -> (i32, i32) {
    %c0_i32 = arith.constant 0 : i32
    %c0_i32_0 = arith.constant 0 : i32
    %c0_i32_1 = arith.constant 0 : i32
    return %c0_i32, %c0_i32_0 : i32, i32
  }
  func.func @transform_3(%arg0: i32) -> (i32, i32) {
    %c0_i32 = arith.constant 0 : i32
    %c0_i32_0 = arith.constant 0 : i32
    return %arg0, %c0_i32 : i32, i32
  }
  func.func @transform_4(%arg0: i32) -> (i32, i32) {
    %c0_i32 = arith.constant 0 : i32
    %c0_i32_0 = arith.constant 0 : i32
    %c0_i32_1 = arith.constant 0 : i32
    return %c0_i32, %c0_i32_0 : i32, i32
  }
  func.func @transform_5(%arg0: i32) -> (i32, i32) {
    %c0_i32 = arith.constant 0 : i32
    %c0_i32_0 = arith.constant 0 : i32
    %c0_i32_1 = arith.constant 0 : i32
    return %c0_i32, %c0_i32_0 : i32, i32
  }
  func.func @transform_6(%arg0: i32) -> (i32, i32) {
    %c0_i32 = arith.constant 0 : i32
    %c0_i32_0 = arith.constant 0 : i32
    return %arg0, %c0_i32 : i32, i32
  }
}

</mosaic_0001>

<llo_original>
// kernel: tpu_custom_call.1
$region0: #{tpu_custom_call.1}
  #allocation0 [shape = 'u32[]', space=smem, size = 0x4, offset = 0x4, fixed_abs, tag = 'smem constant byte address 0x4 - core index']
  #allocation1 [shape = 'u32[144,128]{1,0:T(1,128)}', space=vmem, size = 0x12000, scoped, tag = 'internal scratch']
  %s0 = inlined_call_operand.hbm [shape: f32[16,32], index: 0, kind: input, shape index: {}]
  %s1 = inlined_call_operand.hbm [shape: f32[32,32], index: 1, kind: input, shape index: {}]
  %s2 = inlined_call_operand.vmem [shape: f32[1,32], index: 2, kind: input, shape index: {}]
  %s3 = inlined_call_operand.hbm [shape: f32[16,32], index: 3, kind: input, shape index: {}]
  %s4 = inlined_call_operand.vmem [shape: f32[1,32], index: 4, kind: input, shape index: {}]
  %s5 = inlined_call_operand.vmem [shape: f32[1,32], index: 5, kind: input, shape index: {}]
  %s6 = inlined_call_operand.hbm [shape: f32[16,32], index: 6, kind: output, shape index: {}]
  %s7 = sld [smem:[#allocation0]]
  $region69: #{tpu_custom_call.1} parent=0
    _
  %s9 = ssub.s32 1, %s7
  %s10 = scalar_select 0, %s9, %s7
  $region1: #{tpu_custom_call.1} parent=0
    #allocation2 [shape = 'u8[8192]{0}', space=vmem, size = 0x2000, scoped, tag = 'input window, operand 0']
    #allocation3 [shape = 's32[2]{0}', space=sflag, size = 0x8, scoped, tag = 'scoped memory for tpu_custom_call.1']
    #allocation4 [shape = 's32[2]{0}', space=sflag, size = 0x8, scoped, tag = 'scoped memory for tpu_custom_call.1']
    #allocation5 [shape = 'u8[16384]{0}', space=vmem, size = 0x4000, scoped, tag = 'input window, operand 1, single buffered']
    #allocation6 [shape = 's32[1]{0}', space=sflag, size = 0x4, scoped, tag = 'scoped memory for tpu_custom_call.1']
    #allocation7 [shape = 'u8[8192]{0}', space=vmem, size = 0x2000, scoped, tag = 'input window, operand 3']
    #allocation8 [shape = 'u8[8192]{0}', space=vmem, size = 0x2000, scoped, tag = 'output window, operand 0']
    %11 = vsyncpa [#allocation3], 0
    %s12 = scalar_lea.sflag [#allocation3], 1
    %13 = vsyncpa %s12, 0
    %14 = vsyncpa [#allocation6], 0
    %15 = vsyncpa [#allocation4], 0
    %s16 = scalar_lea.sflag [#allocation4], 1
    %17 = vsyncpa %s16, 0
    loop: start=0, step=1, limit=4
    $region2: #{tpu_custom_call.1} parent=1 // loop_pre_header
      _
    $region3: #{tpu_custom_call.1} parent=1 // loop_header
      %s19 = sphi 0, %s23
      %p20 = scmp.ge.s32.totalorder %s19, 4
      %s29 = sphi 0, %s31
      %s32 = sphi 0, %s29
      %s33 = sphi 0, %s32
      %s49 = sphi 0, %s33
      %s53 = sphi 0, %s53
      %s55 = sphi 0, %s53
      %s56 = sphi 0, %s55
      %s70 = sphi 0, %s56
      %s74 = sphi 0, %s74
      %s76 = sphi 0, %s74
      %s77 = sphi 0, %s76
      %s91 = sphi 0, %s77
      %s97 = sphi 0, %s99
      %s100 = sphi 0, %s97
      %s101 = sphi 0, %s100
      %s117 = sphi 0, %s101
      %s121 = sphi 0, %s121
      %s123 = sphi 0, %s121
      %s124 = sphi 0, %s123
      %s138 = sphi 0, %s124
      %s142 = sphi 0, %s142
      %s144 = sphi 0, %s142
      %s145 = sphi 0, %s144
      %s159 = sphi 0, %s145
      %s165 = sphi 0, %s167
      %s168 = sphi 0, %s165
      %s169 = sphi 0, %s168
      %s185 = sphi 0, %s169
    $region4: #{tpu_custom_call.1} parent=1 // loop_header_branch
      %22 = sbr.rel (%p20) target = $region8
    $region5: #{tpu_custom_call.1} parent=1 // loop_body
      %s24 = ssub.s32 %s19, 1
      %s25 = ssub.s32 %s19, 2
      %s26 = sadd.s32 %s19, 1
      %s27 = ssub.s32 %s19, %s26
      %p28 = scmp.eq.s32.totalorder %s27, 0
      %s30 = sadd.s32 %s29, 1
      %s31 = scalar_select %p28, %s29, %s30
      %p34 = pneg %p28
      %p35 = scmp.eq.s32.totalorder %s19, 1
      %p36 = por %p34, %p35
      %p37 = scmp.ne.s32.totalorder %s29, %s32
      %p38 = scmp.eq.s32.totalorder %s19, 0
      %p39 = por %p37, %p38
      %p40 = scmp.ne.s32.totalorder %s29, %s32
      %p41 = scmp.eq.s32.totalorder %s24, 1
      %p42 = por %p40, %p41
      %p43 = scmp.ne.s32.totalorder %s32, %s33
      %p44 = scmp.eq.s32.totalorder %s24, 0
      %p45 = por %p43, %p44
      %p46 = scmp.ne.s32.totalorder %s32, %s33
      %p47 = scmp.eq.s32.totalorder %s25, 1
      %p48 = por %p46, %p47
      %p50 = scmp.ne.s32.totalorder %s33, %s49
      %p51 = scmp.eq.s32.totalorder %s25, 0
      %p52 = por %p50, %p51
      %s54 = sadd.s32 %s53, 1
      %p57 = scmp.eq.s32.totalorder %s19, 1
      %p58 = scmp.ne.s32.totalorder %s53, %s55
      %p59 = scmp.eq.s32.totalorder %s19, 0
      %p60 = por %p58, %p59
      %p61 = scmp.ne.s32.totalorder %s53, %s55
      %p62 = scmp.eq.s32.totalorder %s24, 1
      %p63 = por %p61, %p62
      %p64 = scmp.ne.s32.totalorder %s55, %s56
      %p65 = scmp.eq.s32.totalorder %s24, 0
      %p66 = por %p64, %p65
      %p67 = scmp.ne.s32.totalorder %s55, %s56
      %p68 = scmp.eq.s32.totalorder %s25, 1
      %p69 = por %p67, %p68
      %p71 = scmp.ne.s32.totalorder %s56, %s70
      %p72 = scmp.eq.s32.totalorder %s25, 0
      %p73 = por %p71, %p72
      %s75 = sadd.s32 %s74, 1
      %p78 = scmp.eq.s32.totalorder %s19, 1
      %p79 = scmp.ne.s32.totalorder %s74, %s76
      %p80 = scmp.eq.s32.totalorder %s19, 0
      %p81 = por %p79, %p80
      %p82 = scmp.ne.s32.totalorder %s74, %s76
      %p83 = scmp.eq.s32.totalorder %s24, 1
      %p84 = por %p82, %p83
      %p85 = scmp.ne.s32.totalorder %s76, %s77
      %p86 = scmp.eq.s32.totalorder %s24, 0
      %p87 = por %p85, %p86
      %p88 = scmp.ne.s32.totalorder %s76, %s77
      %p89 = scmp.eq.s32.totalorder %s25, 1
      %p90 = por %p88, %p89
      %p92 = scmp.ne.s32.totalorder %s77, %s91
      %p93 = scmp.eq.s32.totalorder %s25, 0
      %p94 = por %p92, %p93
      %s95 = ssub.s32 %s19, %s26
      %p96 = scmp.eq.s32.totalorder %s95, 0
      %s98 = sadd.s32 %s97, 1
      %s99 = scalar_select %p96, %s97, %s98
      %p102 = pneg %p96
      %p103 = scmp.eq.s32.totalorder %s19, 1
      %p104 = por %p102, %p103
      %p105 = scmp.ne.s32.totalorder %s97, %s100
      %p106 = scmp.eq.s32.totalorder %s19, 0
      %p107 = por %p105, %p106
      %p108 = scmp.ne.s32.totalorder %s97, %s100
      %p109 = scmp.eq.s32.totalorder %s24, 1
      %p110 = por %p108, %p109
      %p111 = scmp.ne.s32.totalorder %s100, %s101
      %p112 = scmp.eq.s32.totalorder %s24, 0
      %p113 = por %p111, %p112
      %p114 = scmp.ne.s32.totalorder %s100, %s101
      %p115 = scmp.eq.s32.totalorder %s25, 1
      %p116 = por %p114, %p115
      %p118 = scmp.ne.s32.totalorder %s101, %s117
      %p119 = scmp.eq.s32.totalorder %s25, 0
      %p120 = por %p118, %p119
      %s122 = sadd.s32 %s121, 1
      %p125 = scmp.eq.s32.totalorder %s19, 1
      %p126 = scmp.ne.s32.totalorder %s121, %s123
      %p127 = scmp.eq.s32.totalorder %s19, 0
      %p128 = por %p126, %p127
      %p129 = scmp.ne.s32.totalorder %s121, %s123
      %p130 = scmp.eq.s32.totalorder %s24, 1
      %p131 = por %p129, %p130
      %p132 = scmp.ne.s32.totalorder %s123, %s124
      %p133 = scmp.eq.s32.totalorder %s24, 0
      %p134 = por %p132, %p133
      %p135 = scmp.ne.s32.totalorder %s123, %s124
      %p136 = scmp.eq.s32.totalorder %s25, 1
      %p137 = por %p135, %p136
      %p139 = scmp.ne.s32.totalorder %s124, %s138
      %p140 = scmp.eq.s32.totalorder %s25, 0
      %p141 = por %p139, %p140
      %s143 = sadd.s32 %s142, 1
      %p146 = scmp.eq.s32.totalorder %s19, 1
      %p147 = scmp.ne.s32.totalorder %s142, %s144
      %p148 = scmp.eq.s32.totalorder %s19, 0
      %p149 = por %p147, %p148
      %p150 = scmp.ne.s32.totalorder %s142, %s144
      %p151 = scmp.eq.s32.totalorder %s24, 1
      %p152 = por %p150, %p151
      %p153 = scmp.ne.s32.totalorder %s144, %s145
      %p154 = scmp.eq.s32.totalorder %s24, 0
      %p155 = por %p153, %p154
      %p156 = scmp.ne.s32.totalorder %s144, %s145
      %p157 = scmp.eq.s32.totalorder %s25, 1
      %p158 = por %p156, %p157
      %p160 = scmp.ne.s32.totalorder %s145, %s159
      %p161 = scmp.eq.s32.totalorder %s25, 0
      %p162 = por %p160, %p161
      %s163 = ssub.s32 %s19, %s26
      %p164 = scmp.eq.s32.totalorder %s163, 0
      %s166 = sadd.s32 %s165, 1
      %s167 = scalar_select %p164, %s165, %s166
      %p170 = pneg %p164
      %p171 = scmp.eq.s32.totalorder %s19, 1
      %p172 = por %p170, %p171
      %p173 = scmp.ne.s32.totalorder %s165, %s168
      %p174 = scmp.eq.s32.totalorder %s19, 0
      %p175 = por %p173, %p174
      %p176 = scmp.ne.s32.totalorder %s165, %s168
      %p177 = scmp.eq.s32.totalorder %s24, 1
      %p178 = por %p176, %p177
      %p179 = scmp.ne.s32.totalorder %s168, %s169
      %p180 = scmp.eq.s32.totalorder %s24, 0
      %p181 = por %p179, %p180
      %p182 = scmp.ne.s32.totalorder %s168, %s169
      %p183 = scmp.eq.s32.totalorder %s25, 1
      %p184 = por %p182, %p183
      %p186 = scmp.ne.s32.totalorder %s169, %s185
      %p187 = scmp.eq.s32.totalorder %s25, 0
      %p188 = por %p186, %p187
      %p189 = scmp.le.s32.totalorder 1, %s19
      %p190 = scmp.lt.s32.totalorder %s19, 3
      %p191 = pnand %p189, %p190
      %p192 = pneg %p191
      // Predicated region
      $region9: #{tpu_custom_call.1} parent=5 // pred_check
        _
      $region10: #{tpu_custom_call.1} parent=5 // pred_check_branch
        %194 = sbr.rel (%p191) target = $region12
      $region11: #{tpu_custom_call.1} parent=5 // pred_region
        %s195 = ssub.s32 %s19, 1
        // Predicated region
        $region13: #{tpu_custom_call.1} parent=11 // pred_check
          %p196 = pneg %p66
        $region14: #{tpu_custom_call.1} parent=11 // pred_check_branch
          %198 = sbr.rel (%p196) target = $region16
        $region15: #{tpu_custom_call.1} parent=11 // pred_region
          %s200 = ssub.s32 512, 512
          %201 = vsyncadd [#allocation6], %s200
          %s202 = sshll.u32 [#allocation5], 4
          %s203 = int_to_ptr.vmem [resolvable:$true] %s202
          %208 = dma.hbm_to_vmem [thread:$0]  %s1, 512, %s203, [#allocation6], 128, 128, 8
        $region16: #{tpu_custom_call.1} parent=11 // pred_fallthru
          _
        // Predicated region
        $region17: #{tpu_custom_call.1} parent=11 // pred_check
          %p209 = pneg %p87
        $region18: #{tpu_custom_call.1} parent=11 // pred_check_branch
          %211 = sbr.rel (%p209) target = $region20
        $region19: #{tpu_custom_call.1} parent=11 // pred_region
          _
        $region20: #{tpu_custom_call.1} parent=11 // pred_fallthru
          _
        // Predicated region
        $region21: #{tpu_custom_call.1} parent=11 // pred_check
          %p212 = pneg %p134
        $region22: #{tpu_custom_call.1} parent=11 // pred_check_branch
          %214 = sbr.rel (%p212) target = $region24
        $region23: #{tpu_custom_call.1} parent=11 // pred_region
          _
        $region24: #{tpu_custom_call.1} parent=11 // pred_fallthru
          _
        // Predicated region
        $region25: #{tpu_custom_call.1} parent=11 // pred_check
          %p215 = pneg %p155
        $region26: #{tpu_custom_call.1} parent=11 // pred_check_branch
          %217 = sbr.rel (%p215) target = $region28
        $region27: #{tpu_custom_call.1} parent=11 // pred_region
          _
        $region28: #{tpu_custom_call.1} parent=11 // pred_fallthru
          _
      $region12: #{tpu_custom_call.1} parent=5 // pred_fallthru
        _
      %p218 = scmp.lt.s32.totalorder %s19, 2
      // Predicated region
      $region29: #{tpu_custom_call.1} parent=5 // pred_check
        %p219 = pneg %p218
      $region30: #{tpu_custom_call.1} parent=5 // pred_check_branch
        %221 = sbr.rel (%p219) target = $region32
      $region31: #{tpu_custom_call.1} parent=5 // pred_region
        // Predicated region
        $region33: #{tpu_custom_call.1} parent=31 // pred_check
          %p222 = pneg %p39
        $region34: #{tpu_custom_call.1} parent=31 // pred_check_branch
          %224 = sbr.rel (%p222) target = $region36
        $region35: #{tpu_custom_call.1} parent=31 // pred_region
          %s225 = sand.u32 %s19, 1
          %s226 = scalar_lea.sflag [#allocation3], %s225
          %s227 = sand.u32 %s29, 1
          %s228 = smul.addr %s227, 8
          %s229 = scalar_lea.vmem [#allocation2], %s228
          %s231 = ssub.s32 128, 128
          %232 = vsyncadd %s226, %s231
          %s233 = smul.addr %s19, 128
          %s234 = scalar_lea.hbm %s0, %s233
          %s236 = sshll.u32 %s229, 4
          %s237 = int_to_ptr.vmem [resolvable:$true] %s236
          %239 = dma.hbm_to_vmem [thread:$0]  %s234, 128, %s237, %s226
        $region36: #{tpu_custom_call.1} parent=31 // pred_fallthru
          _
        // Predicated region
        $region37: #{tpu_custom_call.1} parent=31 // pred_check
          %p240 = pneg %p107
        $region38: #{tpu_custom_call.1} parent=31 // pred_check_branch
          %242 = sbr.rel (%p240) target = $region40
        $region39: #{tpu_custom_call.1} parent=31 // pred_region
          %s243 = sand.u32 %s19, 1
          %s244 = scalar_lea.sflag [#allocation3], %s243
          %s245 = sand.u32 %s97, 1
          %s246 = smul.addr %s245, 8
          %s247 = scalar_lea.vmem [#allocation7], %s246
          %s249 = ssub.s32 128, 128
          %250 = vsyncadd %s244, %s249
          %s251 = smul.addr %s19, 128
          %s252 = scalar_lea.hbm %s3, %s251
          %s254 = sshll.u32 %s247, 4
          %s255 = int_to_ptr.vmem [resolvable:$true] %s254
          %257 = dma.hbm_to_vmem [thread:$0]  %s252, 128, %s255, %s244
        $region40: #{tpu_custom_call.1} parent=31 // pred_fallthru
          _
      $region32: #{tpu_custom_call.1} parent=5 // pred_fallthru
        _
      %p258 = scmp.le.s32.totalorder 1, %s19
      %p259 = scmp.lt.s32.totalorder %s19, 3
      %p260 = pnand %p258, %p259
      %p261 = pneg %p260
      // Predicated region
      $region41: #{tpu_custom_call.1} parent=5 // pred_check
        _
      $region42: #{tpu_custom_call.1} parent=5 // pred_check_branch
        %263 = sbr.rel (%p260) target = $region44
      $region43: #{tpu_custom_call.1} parent=5 // pred_region
        %s264 = ssub.s32 %s19, 1
        %s265 = sand.u32 %s24, 1
        %s266 = scalar_lea.sflag [#allocation3], %s265
        %s267 = sand.u32 %s32, 1
        %s268 = smul.addr %s267, 8
        %s269 = scalar_lea.vmem [#allocation2], %s268
        // Predicated region
        $region45: #{tpu_custom_call.1} parent=43 // pred_check
          %p270 = pneg %p45
        $region46: #{tpu_custom_call.1} parent=43 // pred_check_branch
          %272 = sbr.rel (%p270) target = $region48
        $region47: #{tpu_custom_call.1} parent=43 // pred_region
          %273 = dma.done %s266, 128
        $region48: #{tpu_custom_call.1} parent=43 // pred_fallthru
          _
        // Predicated region
        $region49: #{tpu_custom_call.1} parent=43 // pred_check
          %p274 = pneg %p66
        $region50: #{tpu_custom_call.1} parent=43 // pred_check_branch
          %276 = sbr.rel (%p274) target = $region52
        $region51: #{tpu_custom_call.1} parent=43 // pred_region
          %277 = dma.done [#allocation6], 512
        $region52: #{tpu_custom_call.1} parent=43 // pred_fallthru
          _
        %s278 = sand.u32 %s24, 1
        %s279 = scalar_lea.sflag [#allocation3], %s278
        %s280 = sand.u32 %s100, 1
        %s281 = smul.addr %s280, 8
        %s282 = scalar_lea.vmem [#allocation7], %s281
        // Predicated region
        $region53: #{tpu_custom_call.1} parent=43 // pred_check
          %p283 = pneg %p113
        $region54: #{tpu_custom_call.1} parent=43 // pred_check_branch
          %285 = sbr.rel (%p283) target = $region56
        $region55: #{tpu_custom_call.1} parent=43 // pred_region
          %286 = dma.done %s279, 128
        $region56: #{tpu_custom_call.1} parent=43 // pred_fallthru
          _
        %s287 = sand.u32 %s24, 1
        %s288 = scalar_lea.sflag [#allocation3], %s287
        %s289 = sand.u32 %s32, 1
        %s290 = smul.addr %s289, 8
        %s291 = scalar_lea.vmem [#allocation2], %s290
        %p292 = pneg %p45
        %p293 = pneg %p42
        %p294 = pneg %p66
        %p295 = pneg %p63
        %p296 = pneg %p87
        %p297 = pneg %p84
        %s298 = sand.u32 %s24, 1
        %s299 = scalar_lea.sflag [#allocation3], %s298
        %s300 = sand.u32 %s100, 1
        %s301 = smul.addr %s300, 8
        %s302 = scalar_lea.vmem [#allocation7], %s301
        %p303 = pneg %p113
        %p304 = pneg %p110
        %p305 = pneg %p134
        %p306 = pneg %p131
        %p307 = pneg %p155
        %p308 = pneg %p152
        %p309 = pneg %p181
        %p310 = pneg %p178
        %s311 = sand.u32 %s168, 1
        %s312 = scalar_lea.sflag [#allocation4], %s311
        %s313 = sand.u32 %s168, 1
        %s314 = smul.addr %s313, 8
        %s315 = scalar_lea.vmem [#allocation8], %s314
        %v316 = vld [vmem:[%s269] sm:$0xff]
        %v317 = vld [vmem:[#allocation5] sm:$0xff]
        %v318 = vld [vmem:[#allocation5 + $0x8] sm:$0xff]
        %v319 = vld [vmem:[#allocation5 + $0x10] sm:$0xff]
        %v320 = vld [vmem:[#allocation5 + $0x18] sm:$0xff]
        %v321 = vld [vmem:[%s2] sm:$0x1]
        %v323 = vlaneseq
        %v324 = vshrl.u32 %v323, 7
        %v325 = vsub.s32 0, %v324
        %v326 = vrot.slane %v321, %v325
        %vm328 = vcmask 261120
        %v330 = vsel %vm328, %v316, 0
        %332 = vmatprep.subr.mxu0 0.0
        %333 = vmatpush1.msra.mxu0 %v317
        %334 = vmatprep.subr.mxu0 0.0
        %335 = vmatpush1.msra.mxu0 %v318
        %336 = vmatprep.subr.mxu0 0.0
        %337 = vmatpush1.msra.mxu0 %v319
        %338 = vmatprep.subr.mxu0 0.0
        %339 = vmatpush1.msra.mxu0 %v320
        %340 = vmatprep.subr.mxu0 0.0
        %341 = vmatpush1.msra.mxu0 0.0
        %342 = vmatprep.subr.mxu0 0.0
        %343 = vmatpush1.msra.mxu0 0.0
        %344 = vmatprep.subr.mxu0 0.0
        %345 = vmatpush1.msra.mxu0 0.0
        %346 = vmatprep.subr.mxu0 0.0
        %347 = vmatpush1.msra.mxu0 0.0
        %348 = vmatprep.subr.mxu0 0.0
        %349 = vmatpush1.msra.mxu0 0.0
        %350 = vmatprep.subr.mxu0 0.0
        %351 = vmatpush1.msra.mxu0 0.0
        %352 = vmatprep.subr.mxu0 0.0
        %353 = vmatpush1.msra.mxu0 0.0
        %354 = vmatprep.subr.mxu0 0.0
        %355 = vmatpush1.msra.mxu0 0.0
        %356 = vmatprep.subr.mxu0 0.0
        %357 = vmatpush1.msra.mxu0 0.0
        %358 = vmatprep.subr.mxu0 0.0
        %359 = vmatpush1.msra.mxu0 0.0
        %360 = vmatprep.subr.mxu0 0.0
        %361 = vmatpush1.msra.mxu0 0.0
        %362 = vmatprep.subr.mxu0 0.0
        %363 = vmatpush1.msra.mxu0 0.0
        %364 = vmatprep.subr.mxu0 0.0
        %365 = vmatpush1.msra.mxu0 0.0
        %366 = vmatprep.subr.mxu0 0.0
        %367 = vmatpush1.msra.mxu0 0.0
        %368 = vmatprep.subr.mxu0 0.0
        %369 = vmatpush1.msra.mxu0 0.0
        %370 = vmatprep.subr.mxu0 0.0
        %371 = vmatpush1.msra.mxu0 0.0
        %372 = vmatprep.subr.mxu0 0.0
        %373 = vmatpush1.msra.mxu0 0.0
        %374 = vmatprep.subr.mxu0 0.0
        %375 = vmatpush1.msra.mxu0 0.0
        %376 = vmatprep.subr.mxu0 0.0
        %377 = vmatpush1.msra.mxu0 0.0
        %378 = vmatprep.subr.mxu0 0.0
        %379 = vmatpush1.msra.mxu0 0.0
        %380 = vmatprep.subr.mxu0 0.0
        %381 = vmatpush1.msra.mxu0 0.0
        %382 = vmatprep.subr.mxu0 0.0
        %383 = vmatpush1.msra.mxu0 0.0
        %384 = vmatprep.subr.mxu0 0.0
        %385 = vmatpush1.msra.mxu0 0.0
        %386 = vmatprep.subr.mxu0 0.0
        %387 = vmatpush1.msra.mxu0 0.0
        %388 = vmatprep.subr.mxu0 0.0
        %389 = vmatpush1.msra.mxu0 0.0
        %390 = vmatprep.subr.mxu0 0.0
        %391 = vmatpush1.msra.mxu0 0.0
        %392 = vmatprep.subr.mxu0 0.0
        %393 = vmatpush1.msra.mxu0 0.0
        %394 = vmatprep.subr.mxu0 0.0
        %395 = vmatpush1.msra.mxu0 0.0
        %396 = vmatprep.mubr.f32.mxu0 0.0
        %397 = vmatmul.mubr.f32.gmra.mrb[0].mxu0 %v330
        %v398 = vpop.f32.mrb[0].mxu0
        %v399 = vadd.f32 %v326, %v398
        %v400 = vpop.f32.mrb[0].mxu0
        %401 = vdwg.mxu0
        %v402 = vld [vmem:[%s282] sm:$0xff]
        %v403 = vadd.f32 %v399, %v402
        %v404 = vsel %vm328, %v403, 0.0
        %405 = vadd.xlane.f32.xlu0 %v404
        %v406 = vpop.xlane.xlu0 %405
        %v407 = vmul.f32 %v406, 0.03125
        %v408 = vsub.f32 %v403, %v407
        %v409 = vmul.f32 %v408, %v408
        %v410 = vsel %vm328, %v409, 0.0
        %411 = vadd.xlane.f32.xlu0 %v410
        %v412 = vpop.xlane.xlu0 %411
        %v413 = vmul.f32 %v412, 0.03125
        %v414 = vadd.f32 %v413, 1e-05
        %v415 = vrsqrt.pop %v414
        %v416 = vmul.f32 %v408, %v415
        %v417 = vld [vmem:[%s4] sm:$0x1]
        %v419 = vlaneseq
        %v420 = vshrl.u32 %v419, 7
        %v421 = vsub.s32 0, %v420
        %v422 = vrot.slane %v417, %v421
        %v424 = vmul.f32 %v416, %v422
        %v425 = vld [vmem:[%s5] sm:$0x1]
        %v427 = vlaneseq
        %v428 = vshrl.u32 %v427, 7
        %v429 = vsub.s32 0, %v428
        %v430 = vrot.slane %v425, %v429
        %v432 = vadd.f32 %v424, %v430
        %433 = vst.msk [vmem:[%s315] sm:$0xff] %vm328, %v432
        %s434 = sand.u32 %s168, 1
        %s435 = scalar_lea.sflag [#allocation4], %s434
        %s436 = sand.u32 %s168, 1
        %s437 = smul.addr %s436, 8
        %s438 = scalar_lea.vmem [#allocation8], %s437
        // Predicated region
        $region57: #{tpu_custom_call.1} parent=43 // pred_check
          %p439 = pneg %p178
        $region58: #{tpu_custom_call.1} parent=43 // pred_check_branch
          %441 = sbr.rel (%p439) target = $region60
        $region59: #{tpu_custom_call.1} parent=43 // pred_region
          %s443 = ssub.s32 128, 128
          %444 = vsyncadd %s435, %s443
          %s445 = smul.addr %s24, 128
          %s446 = scalar_lea.hbm %s6, %s445
          %s448 = sshll.u32 %s438, 4
          %s449 = int_to_ptr.vmem [resolvable:$true] %s448
          %451 = dma.vmem_to_hbm [thread:$0]  %s449, 128, %s446, %s435
        $region60: #{tpu_custom_call.1} parent=43 // pred_fallthru
          _
      $region44: #{tpu_custom_call.1} parent=5 // pred_fallthru
        _
      %p452 = scmp.le.s32.totalorder 2, %s19
      // Predicated region
      $region61: #{tpu_custom_call.1} parent=5 // pred_check
        %p453 = pneg %p452
      $region62: #{tpu_custom_call.1} parent=5 // pred_check_branch
        %455 = sbr.rel (%p453) target = $region64
      $region63: #{tpu_custom_call.1} parent=5 // pred_region
        %s456 = ssub.s32 %s19, 2
        // Predicated region
        $region65: #{tpu_custom_call.1} parent=63 // pred_check
          %p457 = pneg %p184
        $region66: #{tpu_custom_call.1} parent=63 // pred_check_branch
          %459 = sbr.rel (%p457) target = $region68
        $region67: #{tpu_custom_call.1} parent=63 // pred_region
          %s460 = sand.u32 %s169, 1
          %s461 = scalar_lea.sflag [#allocation4], %s460
          %s462 = sand.u32 %s169, 1
          %s463 = smul.addr %s462, 8
          %s464 = scalar_lea.vmem [#allocation8], %s463
          %465 = dma.done %s461, 128
        $region68: #{tpu_custom_call.1} parent=63 // pred_fallthru
          _
      $region64: #{tpu_custom_call.1} parent=5 // pred_fallthru
        _
    $region6: #{tpu_custom_call.1} parent=1 // loop_footer
      %s23 = sadd.s32 1, %s19
    $region7: #{tpu_custom_call.1} parent=1 // loop_footer_branch
      %18 = sbr.rel target = $region3
    $region8: #{tpu_custom_call.1} parent=1 // loop_exit
      _
    %466 = vsyncpa [#allocation3], 1
    %s467 = scalar_lea.sflag [#allocation3], 1
    %468 = vsyncpa %s467, 1
    %469 = vsyncpa [#allocation6], 1
    %470 = vsyncpa [#allocation4], 1
    %s471 = scalar_lea.sflag [#allocation4], 1
    %472 = vsyncpa %s471, 1

// kernel: tpu_custom_call.1
$region0: #{tpu_custom_call.1}
  #allocation0 [shape = 'u32[]', space=smem, size = 0x4, offset = 0x4, fixed_abs, tag = 'smem constant byte address 0x4 - core index']
  #allocation1 [shape = 'u32[144,128]{1,0:T(1,128)}', space=vmem, size = 0x12000, scoped, tag = 'internal scratch']
  %s0 = inlined_call_operand.hbm [shape: f32[16,32], index: 0, kind: input, shape index: {}]
  %s1 = inlined_call_operand.hbm [shape: f32[32,32], index: 1, kind: input, shape index: {}]
  %s2 = inlined_call_operand.vmem [shape: f32[1,32], index: 2, kind: input, shape index: {}]
  %s3 = inlined_call_operand.hbm [shape: f32[16,32], index: 3, kind: input, shape index: {}]
  %s4 = inlined_call_operand.vmem [shape: f32[1,32], index: 4, kind: input, shape index: {}]
  %s5 = inlined_call_operand.vmem [shape: f32[1,32], index: 5, kind: input, shape index: {}]
  %s6 = inlined_call_operand.hbm [shape: f32[16,32], index: 6, kind: output, shape index: {}]
  %s7 = sld [smem:[#allocation0]]
  $region69: #{tpu_custom_call.1} parent=0
    _
  %s9 = ssub.s32 1, %s7
  %s10 = scalar_select 0, %s9, %s7
  $region1: #{tpu_custom_call.1} parent=0
    #allocation2 [shape = 'u8[8192]{0}', space=vmem, size = 0x2000, scoped, tag = 'input window, operand 0']
    #allocation3 [shape = 's32[2]{0}', space=sflag, size = 0x8, scoped, tag = 'scoped memory for tpu_custom_call.1']
    #allocation4 [shape = 's32[2]{0}', space=sflag, size = 0x8, scoped, tag = 'scoped memory for tpu_custom_call.1']
    #allocation5 [shape = 'u8[16384]{0}', space=vmem, size = 0x4000, scoped, tag = 'input window, operand 1, single buffered']
    #allocation6 [shape = 's32[1]{0}', space=sflag, size = 0x4, scoped, tag = 'scoped memory for tpu_custom_call.1']
    #allocation7 [shape = 'u8[8192]{0}', space=vmem, size = 0x2000, scoped, tag = 'input window, operand 3']
    #allocation8 [shape = 'u8[8192]{0}', space=vmem, size = 0x2000, scoped, tag = 'output window, operand 0']
    %11 = vsyncpa [#allocation3], 0
    %s12 = scalar_lea.sflag [#allocation3], 1
    %13 = vsyncpa %s12, 0
    %14 = vsyncpa [#allocation6], 0
    %15 = vsyncpa [#allocation4], 0
    %s16 = scalar_lea.sflag [#allocation4], 1
    %17 = vsyncpa %s16, 0
    loop: start=0, step=1, limit=4
    $region2: #{tpu_custom_call.1} parent=1 // loop_pre_header
      _
    $region3: #{tpu_custom_call.1} parent=1 // loop_header
      %s19 = sphi 0, %s23
      %p20 = scmp.ge.s32.totalorder %s19, 4
      %s29 = sphi 0, %s31
      %s32 = sphi 0, %s29
      %s33 = sphi 0, %s32
      %s49 = sphi 0, %s33
      %s53 = sphi 0, %s53
      %s55 = sphi 0, %s53
      %s56 = sphi 0, %s55
      %s70 = sphi 0, %s56
      %s74 = sphi 0, %s74
      %s76 = sphi 0, %s74
      %s77 = sphi 0, %s76
      %s91 = sphi 0, %s77
      %s97 = sphi 0, %s99
      %s100 = sphi 0, %s97
      %s101 = sphi 0, %s100
      %s117 = sphi 0, %s101
      %s121 = sphi 0, %s121
      %s123 = sphi 0, %s121
      %s124 = sphi 0, %s123
      %s138 = sphi 0, %s124
      %s142 = sphi 0, %s142
      %s144 = sphi 0, %s142
      %s145 = sphi 0, %s144
      %s159 = sphi 0, %s145
      %s165 = sphi 0, %s167
      %s168 = sphi 0, %s165
      %s169 = sphi 0, %s168
      %s185 = sphi 0, %s169
    $region4: #{tpu_custom_call.1} parent=1 // loop_header_branch
      %22 = sbr.rel (%p20) target = $region8
    $region5: #{tpu_custom_call.1} parent=1 // loop_body
      %s24 = ssub.s32 %s19, 1
      %s25 = ssub.s32 %s19, 2
      %s26 = sadd.s32 %s19, 1
      %s27 = ssub.s32 %s19, %s26
      %p28 = scmp.eq.s32.totalorder %s27, 0
      %s30 = sadd.s32 %s29, 1
      %s31 = scalar_select %p28, %s29, %s30
      %p34 = pneg %p28
      %p35 = scmp.eq.s32.totalorder %s19, 1
      %p36 = por %p34, %p35
      %p37 = scmp.ne.s32.totalorder %s29, %s32
      %p38 = scmp.eq.s32.totalorder %s19, 0
      %p39 = por %p37, %p38
      %p40 = scmp.ne.s32.totalorder %s29, %s32
      %p41 = scmp.eq.s32.totalorder %s24, 1
      %p42 = por %p40, %p41
      %p43 = scmp.ne.s32.totalorder %s32, %s33
      %p44 = scmp.eq.s32.totalorder %s24, 0
      %p45 = por %p43, %p44
      %p46 = scmp.ne.s32.totalorder %s32, %s33
      %p47 = scmp.eq.s32.totalorder %s25, 1
      %p48 = por %p46, %p47
      %p50 = scmp.ne.s32.totalorder %s33, %s49
      %p51 = scmp.eq.s32.totalorder %s25, 0
      %p52 = por %p50, %p51
      %s54 = sadd.s32 %s53, 1
      %p57 = scmp.eq.s32.totalorder %s19, 1
      %p58 = scmp.ne.s32.totalorder %s53, %s55
      %p59 = scmp.eq.s32.totalorder %s19, 0
      %p60 = por %p58, %p59
      %p61 = scmp.ne.s32.totalorder %s53, %s55
      %p62 = scmp.eq.s32.totalorder %s24, 1
      %p63 = por %p61, %p62
      %p64 = scmp.ne.s32.totalorder %s55, %s56
      %p65 = scmp.eq.s32.totalorder %s24, 0
      %p66 = por %p64, %p65
      %p67 = scmp.ne.s32.totalorder %s55, %s56
      %p68 = scmp.eq.s32.totalorder %s25, 1
      %p69 = por %p67, %p68
      %p71 = scmp.ne.s32.totalorder %s56, %s70
      %p72 = scmp.eq.s32.totalorder %s25, 0
      %p73 = por %p71, %p72
      %s75 = sadd.s32 %s74, 1
      %p78 = scmp.eq.s32.totalorder %s19, 1
      %p79 = scmp.ne.s32.totalorder %s74, %s76
      %p80 = scmp.eq.s32.totalorder %s19, 0
      %p81 = por %p79, %p80
      %p82 = scmp.ne.s32.totalorder %s74, %s76
      %p83 = scmp.eq.s32.totalorder %s24, 1
      %p84 = por %p82, %p83
      %p85 = scmp.ne.s32.totalorder %s76, %s77
      %p86 = scmp.eq.s32.totalorder %s24, 0
      %p87 = por %p85, %p86
      %p88 = scmp.ne.s32.totalorder %s76, %s77
      %p89 = scmp.eq.s32.totalorder %s25, 1
      %p90 = por %p88, %p89
      %p92 = scmp.ne.s32.totalorder %s77, %s91
      %p93 = scmp.eq.s32.totalorder %s25, 0
      %p94 = por %p92, %p93
      %s95 = ssub.s32 %s19, %s26
      %p96 = scmp.eq.s32.totalorder %s95, 0
      %s98 = sadd.s32 %s97, 1
      %s99 = scalar_select %p96, %s97, %s98
      %p102 = pneg %p96
      %p103 = scmp.eq.s32.totalorder %s19, 1
      %p104 = por %p102, %p103
      %p105 = scmp.ne.s32.totalorder %s97, %s100
      %p106 = scmp.eq.s32.totalorder %s19, 0
      %p107 = por %p105, %p106
      %p108 = scmp.ne.s32.totalorder %s97, %s100
      %p109 = scmp.eq.s32.totalorder %s24, 1
      %p110 = por %p108, %p109
      %p111 = scmp.ne.s32.totalorder %s100, %s101
      %p112 = scmp.eq.s32.totalorder %s24, 0
      %p113 = por %p111, %p112
      %p114 = scmp.ne.s32.totalorder %s100, %s101
      %p115 = scmp.eq.s32.totalorder %s25, 1
      %p116 = por %p114, %p115
      %p118 = scmp.ne.s32.totalorder %s101, %s117
      %p119 = scmp.eq.s32.totalorder %s25, 0
      %p120 = por %p118, %p119
      %s122 = sadd.s32 %s121, 1
      %p125 = scmp.eq.s32.totalorder %s19, 1
      %p126 = scmp.ne.s32.totalorder %s121, %s123
      %p127 = scmp.eq.s32.totalorder %s19, 0
      %p128 = por %p126, %p127
      %p129 = scmp.ne.s32.totalorder %s121, %s123
      %p130 = scmp.eq.s32.totalorder %s24, 1
      %p131 = por %p129, %p130
      %p132 = scmp.ne.s32.totalorder %s123, %s124
      %p133 = scmp.eq.s32.totalorder %s24, 0
      %p134 = por %p132, %p133
      %p135 = scmp.ne.s32.totalorder %s123, %s124
      %p136 = scmp.eq.s32.totalorder %s25, 1
      %p137 = por %p135, %p136
      %p139 = scmp.ne.s32.totalorder %s124, %s138
      %p140 = scmp.eq.s32.totalorder %s25, 0
      %p141 = por %p139, %p140
      %s143 = sadd.s32 %s142, 1
      %p146 = scmp.eq.s32.totalorder %s19, 1
      %p147 = scmp.ne.s32.totalorder %s142, %s144
      %p148 = scmp.eq.s32.totalorder %s19, 0
      %p149 = por %p147, %p148
      %p150 = scmp.ne.s32.totalorder %s142, %s144
      %p151 = scmp.eq.s32.totalorder %s24, 1
      %p152 = por %p150, %p151
      %p153 = scmp.ne.s32.totalorder %s144, %s145
      %p154 = scmp.eq.s32.totalorder %s24, 0
      %p155 = por %p153, %p154
      %p156 = scmp.ne.s32.totalorder %s144, %s145
      %p157 = scmp.eq.s32.totalorder %s25, 1
      %p158 = por %p156, %p157
      %p160 = scmp.ne.s32.totalorder %s145, %s159
      %p161 = scmp.eq.s32.totalorder %s25, 0
      %p162 = por %p160, %p161
      %s163 = ssub.s32 %s19, %s26
      %p164 = scmp.eq.s32.totalorder %s163, 0
      %s166 = sadd.s32 %s165, 1
      %s167 = scalar_select %p164, %s165, %s166
      %p170 = pneg %p164
      %p171 = scmp.eq.s32.totalorder %s19, 1
      %p172 = por %p170, %p171
      %p173 = scmp.ne.s32.totalorder %s165, %s168
      %p174 = scmp.eq.s32.totalorder %s19, 0
      %p175 = por %p173, %p174
      %p176 = scmp.ne.s32.totalorder %s165, %s168
      %p177 = scmp.eq.s32.totalorder %s24, 1
      %p178 = por %p176, %p177
      %p179 = scmp.ne.s32.totalorder %s168, %s169
      %p180 = scmp.eq.s32.totalorder %s24, 0
      %p181 = por %p179, %p180
      %p182 = scmp.ne.s32.totalorder %s168, %s169
      %p183 = scmp.eq.s32.totalorder %s25, 1
      %p184 = por %p182, %p183
      %p186 = scmp.ne.s32.totalorder %s169, %s185
      %p187 = scmp.eq.s32.totalorder %s25, 0
      %p188 = por %p186, %p187
      %p189 = scmp.le.s32.totalorder 1, %s19
      %p190 = scmp.lt.s32.totalorder %s19, 3
      %p191 = pnand %p189, %p190
      %p192 = pneg %p191
      // Predicated region
      $region9: #{tpu_custom_call.1} parent=5 // pred_check
        _
      $region10: #{tpu_custom_call.1} parent=5 // pred_check_branch
        %194 = sbr.rel (%p191) target = $region12
      $region11: #{tpu_custom_call.1} parent=5 // pred_region
        %s195 = ssub.s32 %s19, 1
        // Predicated region
        $region13: #{tpu_custom_call.1} parent=11 // pred_check
          %p196 = pneg %p66
        $region14: #{tpu_custom_call.1} parent=11 // pred_check_branch
          %198 = sbr.rel (%p196) target = $region16
        $region15: #{tpu_custom_call.1} parent=11 // pred_region
          %s200 = ssub.s32 512, 512
          %201 = vsyncadd [#allocation6], %s200
          %s202 = sshll.u32 [#allocation5], 4
          %s203 = int_to_ptr.vmem [resolvable:$true] %s202
          %208 = dma.hbm_to_vmem [thread:$0]  %s1, 512, %s203, [#allocation6], 128, 128, 8
        $region16: #{tpu_custom_call.1} parent=11 // pred_fallthru
          _
        // Predicated region
        $region17: #{tpu_custom_call.1} parent=11 // pred_check
          %p209 = pneg %p87
        $region18: #{tpu_custom_call.1} parent=11 // pred_check_branch
          %211 = sbr.rel (%p209) target = $region20
        $region19: #{tpu_custom_call.1} parent=11 // pred_region
          _
        $region20: #{tpu_custom_call.1} parent=11 // pred_fallthru
          _
        // Predicated region
        $region21: #{tpu_custom_call.1} parent=11 // pred_check
          %p212 = pneg %p134
        $region22: #{tpu_custom_call.1} parent=11 // pred_check_branch
          %214 = sbr.rel (%p212) target = $region24
        $region23: #{tpu_custom_call.1} parent=11 // pred_region
          _
        $region24: #{tpu_custom_call.1} parent=11 // pred_fallthru
          _
        // Predicated region
        $region25: #{tpu_custom_call.1} parent=11 // pred_check
          %p215 = pneg %p155
        $region26: #{tpu_custom_call.1} parent=11 // pred_check_branch
          %217 = sbr.rel (%p215) target = $region28
        $region27: #{tpu_custom_call.1} parent=11 // pred_region
          _
        $region28: #{tpu_custom_call.1} parent=11 // pred_fallthru
          _
      $region12: #{tpu_custom_call.1} parent=5 // pred_fallthru
        _
      %p218 = scmp.lt.s32.totalorder %s19, 2
      // Predicated region
      $region29: #{tpu_custom_call.1} parent=5 // pred_check
        %p219 = pneg %p218
      $region30: #{tpu_custom_call.1} parent=5 // pred_check_branch
        %221 = sbr.rel (%p219) target = $region32
      $region31: #{tpu_custom_call.1} parent=5 // pred_region
        // Predicated region
        $region33: #{tpu_custom_call.1} parent=31 // pred_check
          %p222 = pneg %p39
        $region34: #{tpu_custom_call.1} parent=31 // pred_check_branch
          %224 = sbr.rel (%p222) target = $region36
        $region35: #{tpu_custom_call.1} parent=31 // pred_region
          %s225 = sand.u32 %s19, 1
          %s226 = scalar_lea.sflag [#allocation3], %s225
          %s227 = sand.u32 %s29, 1
          %s228 = smul.addr %s227, 8
          %s229 = scalar_lea.vmem [#allocation2], %s228
          %s231 = ssub.s32 128, 128
          %232 = vsyncadd %s226, %s231
          %s233 = smul.addr %s19, 128
          %s234 = scalar_lea.hbm %s0, %s233
          %s236 = sshll.u32 %s229, 4
          %s237 = int_to_ptr.vmem [resolvable:$true] %s236
          %239 = dma.hbm_to_vmem [thread:$0]  %s234, 128, %s237, %s226
        $region36: #{tpu_custom_call.1} parent=31 // pred_fallthru
          _
        // Predicated region
        $region37: #{tpu_custom_call.1} parent=31 // pred_check
          %p240 = pneg %p107
        $region38: #{tpu_custom_call.1} parent=31 // pred_check_branch
          %242 = sbr.rel (%p240) target = $region40
        $region39: #{tpu_custom_call.1} parent=31 // pred_region
          %s243 = sand.u32 %s19, 1
          %s244 = scalar_lea.sflag [#allocation3], %s243
          %s245 = sand.u32 %s97, 1
          %s246 = smul.addr %s245, 8
          %s247 = scalar_lea.vmem [#allocation7], %s246
          %s249 = ssub.s32 128, 128
          %250 = vsyncadd %s244, %s249
          %s251 = smul.addr %s19, 128
          %s252 = scalar_lea.hbm %s3, %s251
          %s254 = sshll.u32 %s247, 4
          %s255 = int_to_ptr.vmem [resolvable:$true] %s254
          %257 = dma.hbm_to_vmem [thread:$0]  %s252, 128, %s255, %s244
        $region40: #{tpu_custom_call.1} parent=31 // pred_fallthru
          _
      $region32: #{tpu_custom_call.1} parent=5 // pred_fallthru
        _
      %p258 = scmp.le.s32.totalorder 1, %s19
      %p259 = scmp.lt.s32.totalorder %s19, 3
      %p260 = pnand %p258, %p259
      %p261 = pneg %p260
      // Predicated region
      $region41: #{tpu_custom_call.1} parent=5 // pred_check
        _
      $region42: #{tpu_custom_call.1} parent=5 // pred_check_branch
        %263 = sbr.rel (%p260) target = $region44
      $region43: #{tpu_custom_call.1} parent=5 // pred_region
        %s264 = ssub.s32 %s19, 1
        %s265 = sand.u32 %s24, 1
        %s266 = scalar_lea.sflag [#allocation3], %s265
        %s267 = sand.u32 %s32, 1
        %s268 = smul.addr %s267, 8
        %s269 = scalar_lea.vmem [#allocation2], %s268
        // Predicated region
        $region45: #{tpu_custom_call.1} parent=43 // pred_check
          %p270 = pneg %p45
        $region46: #{tpu_custom_call.1} parent=43 // pred_check_branch
          %272 = sbr.rel (%p270) target = $region48
        $region47: #{tpu_custom_call.1} parent=43 // pred_region
          %273 = dma.done %s266, 128
        $region48: #{tpu_custom_call.1} parent=43 // pred_fallthru
          _
        // Predicated region
        $region49: #{tpu_custom_call.1} parent=43 // pred_check
          %p274 = pneg %p66
        $region50: #{tpu_custom_call.1} parent=43 // pred_check_branch
          %276 = sbr.rel (%p274) target = $region52
        $region51: #{tpu_custom_call.1} parent=43 // pred_region
          %277 = dma.done [#allocation6], 512
        $region52: #{tpu_custom_call.1} parent=43 // pred_fallthru
          _
        %s278 = sand.u32 %s24, 1
        %s279 = scalar_lea.sflag [#allocation3], %s278
        %s280 = sand.u32 %s100, 1
        %s281 = smul.addr %s280, 8
        %s282 = scalar_lea.vmem [#allocation7], %s281
        // Predicated region
        $region53: #{tpu_custom_call.1} parent=43 // pred_check
          %p283 = pneg %p113
        $region54: #{tpu_custom_call.1} parent=43 // pred_check_branch
          %285 = sbr.rel (%p283) target = $region56
        $region55: #{tpu_custom_call.1} parent=43 // pred_region
          %286 = dma.done %s279, 128
        $region56: #{tpu_custom_call.1} parent=43 // pred_fallthru
          _
        %s287 = sand.u32 %s24, 1
        %s288 = scalar_lea.sflag [#allocation3], %s287
        %s289 = sand.u32 %s32, 1
        %s290 = smul.addr %s289, 8
        %s291 = scalar_lea.vmem [#allocation2], %s290
        %p292 = pneg %p45
        %p293 = pneg %p42
        %p294 = pneg %p66
        %p295 = pneg %p63
        %p296 = pneg %p87
        %p297 = pneg %p84
        %s298 = sand.u32 %s24, 1
        %s299 = scalar_lea.sflag [#allocation3], %s298
        %s300 = sand.u32 %s100, 1
        %s301 = smul.addr %s300, 8
        %s302 = scalar_lea.vmem [#allocation7], %s301
        %p303 = pneg %p113
        %p304 = pneg %p110
        %p305 = pneg %p134
        %p306 = pneg %p131
        %p307 = pneg %p155
        %p308 = pneg %p152
        %p309 = pneg %p181
        %p310 = pneg %p178
        %s311 = sand.u32 %s168, 1
        %s312 = scalar_lea.sflag [#allocation4], %s311
        %s313 = sand.u32 %s168, 1
        %s314 = smul.addr %s313, 8
        %s315 = scalar_lea.vmem [#allocation8], %s314
        %v316 = vld [vmem:[%s269] sm:$0xff]
        %v317 = vld [vmem:[#allocation5] sm:$0xff]
        %v318 = vld [vmem:[#allocation5 + $0x8] sm:$0xff]
        %v319 = vld [vmem:[#allocation5 + $0x10] sm:$0xff]
        %v320 = vld [vmem:[#allocation5 + $0x18] sm:$0xff]
        %v321 = vld [vmem:[%s2] sm:$0x1]
        %v323 = vlaneseq
        %v324 = vshrl.u32 %v323, 7
        %v325 = vsub.s32 0, %v324
        %v326 = vrot.slane %v321, %v325
        %vm328 = vcmask 261120
        %v330 = vsel %vm328, %v316, 0
        %332 = vmatprep.subr.mxu0 0.0
        %333 = vmatpush1.msra.mxu0 %v317
        %334 = vmatprep.subr.mxu0 0.0
        %335 = vmatpush1.msra.mxu0 %v318
        %336 = vmatprep.subr.mxu0 0.0
        %337 = vmatpush1.msra.mxu0 %v319
        %338 = vmatprep.subr.mxu0 0.0
        %339 = vmatpush1.msra.mxu0 %v320
        %340 = vmatprep.subr.mxu0 0.0
        %341 = vmatpush1.msra.mxu0 0.0
        %342 = vmatprep.subr.mxu0 0.0
        %343 = vmatpush1.msra.mxu0 0.0
        %344 = vmatprep.subr.mxu0 0.0
        %345 = vmatpush1.msra.mxu0 0.0
        %346 = vmatprep.subr.mxu0 0.0
        %347 = vmatpush1.msra.mxu0 0.0
        %348 = vmatprep.subr.mxu0 0.0
        %349 = vmatpush1.msra.mxu0 0.0
        %350 = vmatprep.subr.mxu0 0.0
        %351 = vmatpush1.msra.mxu0 0.0
        %352 = vmatprep.subr.mxu0 0.0
        %353 = vmatpush1.msra.mxu0 0.0
        %354 = vmatprep.subr.mxu0 0.0
        %355 = vmatpush1.msra.mxu0 0.0
        %356 = vmatprep.subr.mxu0 0.0
        %357 = vmatpush1.msra.mxu0 0.0
        %358 = vmatprep.subr.mxu0 0.0
        %359 = vmatpush1.msra.mxu0 0.0
        %360 = vmatprep.subr.mxu0 0.0
        %361 = vmatpush1.msra.mxu0 0.0
        %362 = vmatprep.subr.mxu0 0.0
        %363 = vmatpush1.msra.mxu0 0.0
        %364 = vmatprep.subr.mxu0 0.0
        %365 = vmatpush1.msra.mxu0 0.0
        %366 = vmatprep.subr.mxu0 0.0
        %367 = vmatpush1.msra.mxu0 0.0
        %368 = vmatprep.subr.mxu0 0.0
        %369 = vmatpush1.msra.mxu0 0.0
        %370 = vmatprep.subr.mxu0 0.0
        %371 = vmatpush1.msra.mxu0 0.0
        %372 = vmatprep.subr.mxu0 0.0
        %373 = vmatpush1.msra.mxu0 0.0
        %374 = vmatprep.subr.mxu0 0.0
        %375 = vmatpush1.msra.mxu0 0.0
        %376 = vmatprep.subr.mxu0 0.0
        %377 = vmatpush1.msra.mxu0 0.0
        %378 = vmatprep.subr.mxu0 0.0
        %379 = vmatpush1.msra.mxu0 0.0
        %380 = vmatprep.subr.mxu0 0.0
        %381 = vmatpush1.msra.mxu0 0.0
        %382 = vmatprep.subr.mxu0 0.0
        %383 = vmatpush1.msra.mxu0 0.0
        %384 = vmatprep.subr.mxu0 0.0
        %385 = vmatpush1.msra.mxu0 0.0
        %386 = vmatprep.subr.mxu0 0.0
        %387 = vmatpush1.msra.mxu0 0.0
        %388 = vmatprep.subr.mxu0 0.0
        %389 = vmatpush1.msra.mxu0 0.0
        %390 = vmatprep.subr.mxu0 0.0
        %391 = vmatpush1.msra.mxu0 0.0
        %392 = vmatprep.subr.mxu0 0.0
        %393 = vmatpush1.msra.mxu0 0.0
        %394 = vmatprep.subr.mxu0 0.0
        %395 = vmatpush1.msra.mxu0 0.0
        %396 = vmatprep.mubr.f32.mxu0 0.0
        %397 = vmatmul.mubr.f32.gmra.mrb[0].mxu0 %v330
        %v398 = vpop.f32.mrb[0].mxu0
        %v399 = vadd.f32 %v326, %v398
        %v400 = vpop.f32.mrb[0].mxu0
        %401 = vdwg.mxu0
        %v402 = vld [vmem:[%s282] sm:$0xff]
        %v403 = vadd.f32 %v399, %v402
        %v404 = vsel %vm328, %v403, 0.0
        %405 = vadd.xlane.f32.xlu0 %v404
        %v406 = vpop.xlane.xlu0 %405
        %v407 = vmul.f32 %v406, 0.03125
        %v408 = vsub.f32 %v403, %v407
        %v409 = vmul.f32 %v408, %v408
        %v410 = vsel %vm328, %v409, 0.0
        %411 = vadd.xlane.f32.xlu0 %v410
        %v412 = vpop.xlane.xlu0 %411
        %v413 = vmul.f32 %v412, 0.03125
        %v414 = vadd.f32 %v413, 1e-05
        %v415 = vrsqrt.pop %v414
        %v416 = vmul.f32 %v408, %v415
        %v417 = vld [vmem:[%s4] sm:$0x1]
        %v419 = vlaneseq
        %v420 = vshrl.u32 %v419, 7
        %v421 = vsub.s32 0, %v420
        %v422 = vrot.slane %v417, %v421
        %v424 = vmul.f32 %v416, %v422
        %v425 = vld [vmem:[%s5] sm:$0x1]
        %v427 = vlaneseq
        %v428 = vshrl.u32 %v427, 7
        %v429 = vsub.s32 0, %v428
        %v430 = vrot.slane %v425, %v429
        %v432 = vadd.f32 %v424, %v430
        %433 = vst.msk [vmem:[%s315] sm:$0xff] %vm328, %v432
        %s434 = sand.u32 %s168, 1
        %s435 = scalar_lea.sflag [#allocation4], %s434
        %s436 = sand.u32 %s168, 1
        %s437 = smul.addr %s436, 8
        %s438 = scalar_lea.vmem [#allocation8], %s437
        // Predicated region
        $region57: #{tpu_custom_call.1} parent=43 // pred_check
          %p439 = pneg %p178
        $region58: #{tpu_custom_call.1} parent=43 // pred_check_branch
          %441 = sbr.rel (%p439) target = $region60
        $region59: #{tpu_custom_call.1} parent=43 // pred_region
          %s443 = ssub.s32 128, 128
          %444 = vsyncadd %s435, %s443
          %s445 = smul.addr %s24, 128
          %s446 = scalar_lea.hbm %s6, %s445
          %s448 = sshll.u32 %s438, 4
          %s449 = int_to_ptr.vmem [resolvable:$true] %s448
          %451 = dma.vmem_to_hbm [thread:$0]  %s449, 128, %s446, %s435
        $region60: #{tpu_custom_call.1} parent=43 // pred_fallthru
          _
      $region44: #{tpu_custom_call.1} parent=5 // pred_fallthru
        _
      %p452 = scmp.le.s32.totalorder 2, %s19
      // Predicated region
      $region61: #{tpu_custom_call.1} parent=5 // pred_check
        %p453 = pneg %p452
      $region62: #{tpu_custom_call.1} parent=5 // pred_check_branch
        %455 = sbr.rel (%p453) target = $region64
      $region63: #{tpu_custom_call.1} parent=5 // pred_region
        %s456 = ssub.s32 %s19, 2
        // Predicated region
        $region65: #{tpu_custom_call.1} parent=63 // pred_check
          %p457 = pneg %p184
        $region66: #{tpu_custom_call.1} parent=63 // pred_check_branch
          %459 = sbr.rel (%p457) target = $region68
        $region67: #{tpu_custom_call.1} parent=63 // pred_region
          %s460 = sand.u32 %s169, 1
          %s461 = scalar_lea.sflag [#allocation4], %s460
          %s462 = sand.u32 %s169, 1
          %s463 = smul.addr %s462, 8
          %s464 = scalar_lea.vmem [#allocation8], %s463
          %465 = dma.done %s461, 128
        $region68: #{tpu_custom_call.1} parent=63 // pred_fallthru
          _
      $region64: #{tpu_custom_call.1} parent=5 // pred_fallthru
        _
    $region6: #{tpu_custom_call.1} parent=1 // loop_footer
      %s23 = sadd.s32 1, %s19
    $region7: #{tpu_custom_call.1} parent=1 // loop_footer_branch
      %18 = sbr.rel target = $region3
    $region8: #{tpu_custom_call.1} parent=1 // loop_exit
      _
    %466 = vsyncpa [#allocation3], 1
    %s467 = scalar_lea.sflag [#allocation3], 1
    %468 = vsyncpa %s467, 1
    %469 = vsyncpa [#allocation6], 1
    %470 = vsyncpa [#allocation4], 1
    %s471 = scalar_lea.sflag [#allocation4], 1
    %472 = vsyncpa %s471, 1

</llo_original>
